<compile_context>
chip_gen: v5e
topology: v5e:2x2
jax: 0.10.0
libtpu: 0.0.40
codegen_flags: <defaults>
</compile_context>

<pallas_src>
import functools

import jax
import jax.numpy as jnp
from jax import lax
from jax.experimental import pallas as pl
from jax.experimental.pallas import tpu as pltpu

_LANES = 128
_ROW_ALIGN = 32          # block rows multiple of 32 -> valid for f32/bf16/int8 packing
_MAX_BLOCK_ROWS = 1024   # 1024 x 128 x 4B = 512 KiB per f32 input buffer
_N_SPLITS = 2            # leading "parallel" axis (sharded across v7x's 2 TCs)


def _round_up(x, m):
    return ((x + m - 1) // m) * m


def _focal_elementwise(x, t, alpha, gamma):
    """f32 elementwise focal loss; gamma power specialized at trace time."""
    p = jax.nn.sigmoid(x)
    p = jnp.clip(p, 1e-7, 1.0 - 1e-7)
    pt = p * t + (1.0 - p) * (1.0 - t)
    alpha_t = alpha * t + (1.0 - alpha) * (1.0 - t)
    one_m_pt = 1.0 - pt
    g = float(gamma)
    if g == 0.0:
        mod = jnp.ones_like(pt)
    elif g == float(int(g)) and 1 <= int(g) <= 4:
        mod = one_m_pt
        for _ in range(int(g) - 1):
            mod = mod * one_m_pt           # repeated multiply: no pow -> exp/log on EUP
    else:
        mod = one_m_pt ** g                # non-integer gamma falls back to pow
    return -alpha_t * mod * jnp.log(pt)


def _focal_reduce_kernel(logits_ref, targets_ref, out_ref, acc_ref, *,
                         alpha, gamma, scale, n_valid, tiles_per_split,
                         apply_mask):
    """Per-tile focal loss accumulated into a full-tile vector accumulator."""
    j = pl.program_id(1)

    @pl.when(j == 0)
    def _():
        acc_ref[...] = jnp.zeros_like(acc_ref)

    x = logits_ref[...].astype(jnp.float32)
    t = targets_ref[...].astype(jnp.float32)
    fl = _focal_elementwise(x, t, alpha, gamma)

    if apply_mask:
        # In-kernel padding mask from the flat element index (no extra HBM input).
        # TODO(synk): flat index is int32; n must be < 2**31 elements.
        block_rows = logits_ref.shape[0]
        tile_idx = pl.program_id(0) * tiles_per_split + j
        base = tile_idx * (block_rows * _LANES)
        row = lax.broadcasted_iota(jnp.int32, fl.shape, 0)
        lane = lax.broadcasted_iota(jnp.int32, fl.shape, 1)
        flat_idx = base + row * _LANES + lane
        fl = jnp.where(flat_idx < n_valid, fl, 0.0)

    acc_ref[...] += fl   # pure VPU add on the loop path (no XLU reduce per step)

    @pl.when(j == pl.num_programs(1) - 1)
    def _():
        # Single cross-lane/sublane reduce, once per split.
        out_ref[...] = jnp.sum(acc_ref[...], keepdims=True) * scale


def _focal_none_kernel(logits_ref, targets_ref, out_ref, *, alpha, gamma):
    """Per-tile focal loss, no reduction (for reduction='none')."""
    x = logits_ref[...].astype(jnp.float32)
    t = targets_ref[...].astype(jnp.float32)
    out_ref[...] = _focal_elementwise(x, t, alpha, gamma).astype(out_ref.dtype)


def _pad_to_slab(flat, rows_total):
    pad = rows_total * _LANES - flat.shape[0]
    if pad:
        flat = jnp.concatenate([flat, jnp.zeros((pad,), flat.dtype)])
    return flat.reshape(rows_total, _LANES)


def binary_focal_loss(logits, targets, alpha=0.25, gamma=2.0, reduction="mean"):
    """Pallas TPU implementation of BinaryFocalLoss.forward."""
    logits = jnp.asarray(logits)
    targets = jnp.asarray(targets)
    orig_shape = logits.shape
    n = logits.size

    # Keep native floating dtypes (bf16 callers stream half the HBM bytes);
    # only non-float targets (bool/int) are promoted so the kernel can cast.
    if not jnp.issubdtype(targets.dtype, jnp.floating):
        targets = targets.astype(jnp.float32)

    flat_l = logits.reshape(-1)
    flat_t = targets.reshape(-1)

    needed_rows = max(1, -(-n // _LANES))
    block_rows = min(_MAX_BLOCK_ROWS, _round_up(needed_rows, _ROW_ALIGN))

    if reduction in ("mean", "sum"):
        tiles_needed = -(-needed_rows // block_rows)
        tiles_per_split = -(-tiles_needed // _N_SPLITS)
        rows_total = _N_SPLITS * tiles_per_split * block_rows
        apply_mask = (rows_total * _LANES) != n

        l2d = _pad_to_slab(flat_l, rows_total)
        t2d = _pad_to_slab(flat_t, rows_total)

        scale = 1.0 / float(n) if reduction == "mean" else 1.0
        kernel = functools.partial(
            _focal_reduce_kernel, alpha=float(alpha), gamma=float(gamma),
            scale=float(scale), n_valid=int(n),
            tiles_per_split=int(tiles_per_split), apply_mask=bool(apply_mask))

        in_blk = pl.BlockSpec(
            (block_rows, _LANES),
            lambda c, j, _t=int(tiles_per_split): (c * _t + j, 0))

        partials = pl.pallas_call(
            kernel,
            out_shape=jax.ShapeDtypeStruct((_N_SPLITS, 1, 1), jnp.float32),
            grid_spec=pltpu.PrefetchScalarGridSpec(
                num_scalar_prefetch=0,
                grid=(_N_SPLITS, tiles_per_split),
                in_specs=[in_blk, in_blk],
                out_specs=pl.BlockSpec((None, 1, 1), lambda c, j: (c, 0, 0)),
                scratch_shapes=[pltpu.VMEM((block_rows, _LANES), jnp.float32)],
            ),
            compiler_params=pltpu.CompilerParams(
                dimension_semantics=("parallel", "arbitrary")),
        )(l2d, t2d)
        # Combine the per-core partials (2 elements) in the wrapper.
        return jnp.sum(partials)

    elif reduction == "none":
        tiles = -(-needed_rows // block_rows)
        rows_total = tiles * block_rows
        l2d = _pad_to_slab(flat_l, rows_total)
        t2d = _pad_to_slab(flat_t, rows_total)

        blk = pl.BlockSpec((block_rows, _LANES), lambda i: (i, 0))
        kernel = functools.partial(
            _focal_none_kernel, alpha=float(alpha), gamma=float(gamma))
        out2d = pl.pallas_call(
            kernel,
            out_shape=jax.ShapeDtypeStruct((rows_total, _LANES), logits.dtype),
            grid_spec=pltpu.PrefetchScalarGridSpec(
                num_scalar_prefetch=0,
                grid=(tiles,),
                in_specs=[blk, blk],
                out_specs=blk,
            ),
            compiler_params=pltpu.CompilerParams(
                dimension_semantics=("parallel",)),
        )(l2d, t2d)
        return out2d.reshape(-1)[:n].reshape(orig_shape)

    else:
        raise ValueError(f"unknown reduction: {reduction}")


def _reference_focal_loss(logits, targets, alpha=0.25, gamma=2.0,
                          reduction="mean"):
    p = jax.nn.sigmoid(logits.astype(jnp.float32))
    p = jnp.clip(p, 1e-7, 1.0 - 1e-7)
    t = targets.astype(jnp.float32)
    pt = p * t + (1.0 - p) * (1.0 - t)
    alpha_t = alpha * t + (1.0 - alpha) * (1.0 - t)
    fl = -alpha_t * (1.0 - pt) ** gamma * jnp.log(pt)
    if reduction == "mean":
        return fl.mean()
    if reduction == "sum":
        return fl.sum()
    return fl


if __name__ == "__main__":
    key = jax.random.PRNGKey(0)
    k1, k2 = jax.random.split(key)
    # NCHW-style logits, binary targets (same shape), as in prompt-based seg.
    shape = (2, 4, 16, 16)
    logits = jax.random.normal(k1, shape, dtype=jnp.float32) * 2.0
    targets = (jax.random.uniform(k2, shape) > 0.5).astype(jnp.float32)

    loss = binary_focal_loss(logits, targets, alpha=0.25, gamma=2.0,
                             reduction="mean")
    loss = jax.block_until_ready(loss)
    ref = _reference_focal_loss(logits, targets, 0.25, 2.0, "mean")
    assert jnp.allclose(loss, ref, rtol=1e-5, atol=1e-6), (loss, ref)

    # also exercise 'sum' and 'none' paths
    loss_sum = jax.block_until_ready(
        binary_focal_loss(logits, targets, reduction="sum"))
    assert jnp.allclose(loss_sum,
                        _reference_focal_loss(logits, targets,
                                              reduction="sum"),
                        rtol=1e-5, atol=1e-4)
    loss_none = jax.block_until_ready(
        binary_focal_loss(logits, targets, reduction="none"))
    assert jnp.allclose(loss_none,
                        _reference_focal_loss(logits, targets,
                                              reduction="none"),
                        rtol=1e-5, atol=1e-6)

    print("KERNEL_OK")
</pallas_src>

<mosaic_0001>
module attributes {stable_mosaic.version = 11 : i64} {
  func.func @_focal_reduce_kernel(%arg0: i32, %arg1: i32, %arg2: memref<32x128xf32, #tpu.memory_space<vmem>>, %arg3: memref<32x128xf32, #tpu.memory_space<vmem>>, %arg4: memref<1x1x1xf32, #tpu.memory_space<vmem>>, %arg5: memref<32x128xf32, #tpu.memory_space<vmem>>) attributes {dimension_semantics = [#tpu.dimension_semantics<parallel>, #tpu.dimension_semantics<arbitrary>], iteration_bounds = array<i64: 2, 1>, scalar_prefetch = 0 : i64, scratch_operands = 1 : i64, tpu.core_type = #tpu.core_type<tc>, window_params = [{transform_indices = @transform_0, window_bounds = array<i64: 32, 128>}, {transform_indices = @transform_1, window_bounds = array<i64: 32, 128>}, {transform_indices = @transform_2, window_bounds = array<i64: 1, 1, 1>}]} {
    %c0_i32 = arith.constant 0 : i32
    %0 = arith.cmpi eq, %arg1, %c0_i32 : i32
    %1 = arith.extui %0 : i1 to i32
    %c0_i32_0 = arith.constant 0 : i32
    %2 = arith.cmpi ne, %1, %c0_i32_0 : i32
    scf.if %2 {
      %cst_20 = arith.constant 0.000000e+00 : f32
      %56 = vector.broadcast %cst_20 : f32 to vector<32x128xf32>
      %c0_21 = arith.constant 0 : index
      %c0_22 = arith.constant 0 : index
      %57 = vector.load %arg5[%c0_21, %c0_22] : memref<32x128xf32, #tpu.memory_space<vmem>>, vector<32x128xf32>
      tpu.vector_store %arg5[%c0_21, %c0_22], %56 {strides = array<i32>} : memref<32x128xf32, #tpu.memory_space<vmem>>, vector<32x128xf32>,
    } else {
    }
    %c0 = arith.constant 0 : index
    %c0_1 = arith.constant 0 : index
    %3 = vector.load %arg2[%c0, %c0_1] : memref<32x128xf32, #tpu.memory_space<vmem>>, vector<32x128xf32>
    %c0_2 = arith.constant 0 : index
    %c0_3 = arith.constant 0 : index
    %4 = vector.load %arg3[%c0_2, %c0_3] : memref<32x128xf32, #tpu.memory_space<vmem>>, vector<32x128xf32>
    %5 = arith.negf %3 : vector<32x128xf32>
    %6 = math.exp %5 : vector<32x128xf32>
    %cst = arith.constant 1.000000e+00 : f32
    %7 = vector.broadcast %cst : f32 to vector<32x128xf32>
    %8 = arith.addf %7, %6 : vector<32x128xf32>
    %9 = arith.divf %7, %8 : vector<32x128xf32>
    %cst_4 = arith.constant 1.000000e-07 : f32
    %cst_5 = arith.constant 0.99999988 : f32
    %10 = vector.broadcast %cst_4 : f32 to vector<32x128xf32>
    %11 = arith.maximumf %10, %9 : vector<32x128xf32>
    %12 = vector.broadcast %cst_5 : f32 to vector<32x128xf32>
    %13 = arith.minimumf %12, %11 : vector<32x128xf32>
    %14 = arith.mulf %13, %4 : vector<32x128xf32>
    %cst_6 = arith.constant 1.000000e+00 : f32
    %15 = vector.broadcast %cst_6 : f32 to vector<32x128xf32>
    %16 = arith.subf %15, %13 : vector<32x128xf32>
    %cst_7 = arith.constant 1.000000e+00 : f32
    %17 = vector.broadcast %cst_7 : f32 to vector<32x128xf32>
    %18 = arith.subf %17, %4 : vector<32x128xf32>
    %19 = arith.mulf %16, %18 : vector<32x128xf32>
    %20 = arith.addf %14, %19 : vector<32x128xf32>
    %cst_8 = arith.constant 2.500000e-01 : f32
    %21 = vector.broadcast %cst_8 : f32 to vector<32x128xf32>
    %22 = arith.mulf %21, %4 : vector<32x128xf32>
    %cst_9 = arith.constant 1.000000e+00 : f32
    %23 = vector.broadcast %cst_9 : f32 to vector<32x128xf32>
    %24 = arith.subf %23, %4 : vector<32x128xf32>
    %cst_10 = arith.constant 7.500000e-01 : f32
    %25 = vector.broadcast %cst_10 : f32 to vector<32x128xf32>
    %26 = arith.mulf %25, %24 : vector<32x128xf32>
    %27 = arith.addf %22, %26 : vector<32x128xf32>
    %cst_11 = arith.constant 1.000000e+00 : f32
    %28 = vector.broadcast %cst_11 : f32 to vector<32x128xf32>
    %29 = arith.subf %28, %20 : vector<32x128xf32>
    %30 = arith.mulf %29, %29 : vector<32x128xf32>
    %cst_12 = arith.constant 0.000000e+00 : f32
    %31 = vector.broadcast %cst_12 : f32 to vector<32x128xf32>
    %32 = arith.subf %31, %27 : vector<32x128xf32>
    %33 = arith.mulf %32, %30 : vector<32x128xf32>
    %34 = math.log %20 : vector<32x128xf32>
    %35 = arith.mulf %33, %34 : vector<32x128xf32>
    %c1_i32 = arith.constant 1 : i32
    %36 = arith.muli %arg0, %c1_i32 : i32
    %37 = arith.addi %36, %arg1 : i32
    %c4096_i32 = arith.constant 4096 : i32
    %38 = arith.muli %37, %c4096_i32 : i32
    %39 = tpu.iota {dimensions = array<i32: 0>} : vector<32x128xi32>
    %40 = tpu.iota {dimensions = array<i32: 1>} : vector<32x128xi32>
    %c128_i32 = arith.constant 128 : i32
    %41 = vector.broadcast %c128_i32 : i32 to vector<32x128xi32>
    %42 = arith.muli %39, %41 : vector<32x128xi32>
    %43 = vector.broadcast %38 : i32 to vector<32x128xi32>
    %44 = arith.addi %43, %42 : vector<32x128xi32>
    %45 = arith.addi %44, %40 : vector<32x128xi32>
    %c2048_i32 = arith.constant 2048 : i32
    %46 = vector.broadcast %c2048_i32 : i32 to vector<32x128xi32>
    %47 = arith.cmpi slt, %45, %46 : vector<32x128xi32>
    %cst_13 = arith.constant 0.000000e+00 : f32
    %48 = vector.broadcast %cst_13 : f32 to vector<32x128xf32>
    %49 = arith.select %47, %35, %48 : vector<32x128xi1>, vector<32x128xf32>
    %c0_14 = arith.constant 0 : index
    %c0_15 = arith.constant 0 : index
    %50 = vector.load %arg5[%c0_14, %c0_15] : memref<32x128xf32, #tpu.memory_space<vmem>>, vector<32x128xf32>
    %51 = arith.addf %50, %49 : vector<32x128xf32>
    %c0_16 = arith.constant 0 : index
    %c0_17 = arith.constant 0 : index
    %52 = vector.load %arg5[%c0_16, %c0_17] : memref<32x128xf32, #tpu.memory_space<vmem>>, vector<32x128xf32>
    tpu.vector_store %arg5[%c0_16, %c0_17], %51 {strides = array<i32>} : memref<32x128xf32, #tpu.memory_space<vmem>>, vector<32x128xf32>,
    %c0_i32_18 = arith.constant 0 : i32
    %53 = arith.cmpi eq, %arg1, %c0_i32_18 : i32
    %54 = arith.extui %53 : i1 to i32
    %c0_i32_19 = arith.constant 0 : i32
    %55 = arith.cmpi ne, %54, %c0_i32_19 : i32
    scf.if %55 {
      %c0_20 = arith.constant 0 : index
      %c0_21 = arith.constant 0 : index
      %56 = vector.load %arg5[%c0_20, %c0_21] : memref<32x128xf32, #tpu.memory_space<vmem>>, vector<32x128xf32>
      %57 = vector.shape_cast %56 : vector<32x128xf32> to vector<1x32x128xf32>
      %cst_22 = arith.constant dense<0.000000e+00> : vector<1xf32>
      %58 = vector.multi_reduction <add>, %57, %cst_22 [1, 2] : vector<1x32x128xf32> to vector<1xf32>
      %59 = vector.shape_cast %58 : vector<1xf32> to vector<1x1x1xf32>
      %60 = vector.extract %59[0, 0, 0] : f32 from vector<1x1x1xf32>
      %61 = vector.broadcast %60 : f32 to vector<1x1xf32>
      %cst_23 = arith.constant 4.8828125E-4 : f32
      %62 = vector.broadcast %cst_23 : f32 to vector<1x1xf32>
      %63 = arith.mulf %61, %62 : vector<1x1xf32>
      %c0_24 = arith.constant 0 : index
      %c0_25 = arith.constant 0 : index
      %c0_26 = arith.constant 0 : index
      %64 = vector.load %arg4[%c0_24, %c0_25, %c0_26] : memref<1x1x1xf32, #tpu.memory_space<vmem>>, vector<1x1x1xf32>
      %65 = vector.shape_cast %64 : vector<1x1x1xf32> to vector<1x1xf32>
      %66 = vector.shape_cast %63 : vector<1x1xf32> to vector<1x1x1xf32>
      tpu.vector_store %arg4[%c0_24, %c0_25, %c0_26], %66 {strides = array<i32>} : memref<1x1x1xf32, #tpu.memory_space<vmem>>, vector<1x1x1xf32>,
    } else {
    }
    return
  }
  func.func @transform_0(%arg0: i32, %arg1: i32) -> (i32, i32) {
    %c1_i32 = arith.constant 1 : i32
    %0 = arith.muli %arg0, %c1_i32 : i32
    %1 = arith.addi %0, %arg1 : i32
    %c0_i32 = arith.constant 0 : i32
    %c0_i32_0 = arith.constant 0 : i32
    return %1, %c0_i32 : i32, i32
  }
  func.func @transform_1(%arg0: i32, %arg1: i32) -> (i32, i32) {
    %c1_i32 = arith.constant 1 : i32
    %0 = arith.muli %arg0, %c1_i32 : i32
    %1 = arith.addi %0, %arg1 : i32
    %c0_i32 = arith.constant 0 : i32
    %c0_i32_0 = arith.constant 0 : i32
    return %1, %c0_i32 : i32, i32
  }
  func.func @transform_2(%arg0: i32, %arg1: i32) -> (i32, i32, i32) {
    %c0_i32 = arith.constant 0 : i32
    %c0_i32_0 = arith.constant 0 : i32
    %c0_i32_1 = arith.constant 0 : i32
    return %arg0, %c0_i32, %c0_i32_0 : i32, i32, i32
  }
}

</mosaic_0001>

<llo_original>
// kernel: tpu_custom_call.1
$region0: #{tpu_custom_call.1}
  #allocation0 [shape = 'u32[]', space=smem, size = 0x4, offset = 0x4, fixed_abs, tag = 'smem constant byte address 0x4 - core index']
  #allocation1 [shape = 'u32[72,128]{1,0:T(1,128)}', space=vmem, size = 0x9000, scoped, tag = 'internal scratch']
  #allocation2 [shape = 'f32[32,128]{1,0:T(8,128)}', space=vmem, size = 0x4000, scoped, tag = 'scratch operand']
  %s0 = inlined_call_operand.hbm [shape: f32[64,128], index: 0, kind: input, shape index: {}]
  %s1 = inlined_call_operand.hbm [shape: f32[64,128], index: 1, kind: input, shape index: {}]
  %s2 = inlined_call_operand.vmem [shape: f32[2,1,1], index: 2, kind: output, shape index: {}]
  %s3 = sld [smem:[#allocation0]]
  $region57: #{tpu_custom_call.1} parent=0
    _
  %s5 = ssub.s32 1, %s3
  %s6 = scalar_select 0, %s5, %s3
  $region1: #{tpu_custom_call.1} parent=0
    #allocation3 [shape = 'u8[32768]{0}', space=vmem, size = 0x8000, scoped, tag = 'input window, operand 0']
    #allocation4 [shape = 's32[2]{0}', space=sflag, size = 0x8, scoped, tag = 'scoped memory for tpu_custom_call.1']
    #allocation5 [shape = 'u8[32768]{0}', space=vmem, size = 0x8000, scoped, tag = 'input window, operand 1']
    #allocation6 [shape = 's32[2]{0}', space=sflag, size = 0x8, scoped, tag = 'scoped memory for tpu_custom_call.1']
    %7 = vsyncpa [#allocation4], 0
    %s8 = scalar_lea.sflag [#allocation4], 1
    %9 = vsyncpa %s8, 0
    %10 = vsyncpa [#allocation6], 0
    %s11 = scalar_lea.sflag [#allocation6], 1
    %12 = vsyncpa %s11, 0
    loop: start=0, step=1, limit=4
    $region2: #{tpu_custom_call.1} parent=1 // loop_pre_header
      _
    $region3: #{tpu_custom_call.1} parent=1 // loop_header
      %s14 = sphi 0, %s18
      %p15 = scmp.ge.s32.totalorder %s14, 4
      %s21 = sphi 0, %s33
      %s22 = sphi 0, %s29
      %s23 = sphi 0, %s21
      %s24 = sphi 0, %s22
      %s25 = sphi 0, %s23
      %s26 = sphi 0, %s24
      %s38 = sphi 0, %s40
      %s41 = sphi 0, %s38
      %s42 = sphi 0, %s41
      %s58 = sphi 0, %s42
      %s66 = sphi 0, %s68
      %s69 = sphi 0, %s66
      %s70 = sphi 0, %s69
      %s86 = sphi 0, %s70
      %s92 = sphi 0, %s94
      %s95 = sphi 0, %s92
      %s96 = sphi 0, %s95
      %s112 = sphi 0, %s96
    $region4: #{tpu_custom_call.1} parent=1 // loop_header_branch
      %17 = sbr.rel (%p15) target = $region8
    $region5: #{tpu_custom_call.1} parent=1 // loop_body
      %s19 = ssub.s32 %s14, 1
      %s20 = ssub.s32 %s14, 2
      %s27 = sadd.s32 1, %s22
      %p28 = scmp.ge.s32.totalorder %s27, 1
      %s29 = scalar_select %p28, 0, %s27
      %s30 = sadd.s32 1, %s21
      %s31 = scalar_select %p28, %s30, %s21
      %p32 = scmp.ge.s32.totalorder %s31, 2
      %s33 = scalar_select %p32, 0, %s31
      %s34 = sadd.s32 %s21, %s22
      %s35 = sadd.s32 %s33, %s29
      %s36 = ssub.s32 %s34, %s35
      %p37 = scmp.eq.s32.totalorder %s36, 0
      %s39 = sadd.s32 %s38, 1
      %s40 = scalar_select %p37, %s38, %s39
      %p43 = pneg %p37
      %p44 = scmp.eq.s32.totalorder %s14, 1
      %p45 = por %p43, %p44
      %p46 = scmp.ne.s32.totalorder %s38, %s41
      %p47 = scmp.eq.s32.totalorder %s14, 0
      %p48 = por %p46, %p47
      %p49 = scmp.ne.s32.totalorder %s38, %s41
      %p50 = scmp.eq.s32.totalorder %s19, 1
      %p51 = por %p49, %p50
      %p52 = scmp.ne.s32.totalorder %s41, %s42
      %p53 = scmp.eq.s32.totalorder %s19, 0
      %p54 = por %p52, %p53
      %p55 = scmp.ne.s32.totalorder %s41, %s42
      %p56 = scmp.eq.s32.totalorder %s20, 1
      %p57 = por %p55, %p56
      %p59 = scmp.ne.s32.totalorder %s42, %s58
      %p60 = scmp.eq.s32.totalorder %s20, 0
      %p61 = por %p59, %p60
      %s62 = sadd.s32 %s21, %s22
      %s63 = sadd.s32 %s33, %s29
      %s64 = ssub.s32 %s62, %s63
      %p65 = scmp.eq.s32.totalorder %s64, 0
      %s67 = sadd.s32 %s66, 1
      %s68 = scalar_select %p65, %s66, %s67
      %p71 = pneg %p65
      %p72 = scmp.eq.s32.totalorder %s14, 1
      %p73 = por %p71, %p72
      %p74 = scmp.ne.s32.totalorder %s66, %s69
      %p75 = scmp.eq.s32.totalorder %s14, 0
      %p76 = por %p74, %p75
      %p77 = scmp.ne.s32.totalorder %s66, %s69
      %p78 = scmp.eq.s32.totalorder %s19, 1
      %p79 = por %p77, %p78
      %p80 = scmp.ne.s32.totalorder %s69, %s70
      %p81 = scmp.eq.s32.totalorder %s19, 0
      %p82 = por %p80, %p81
      %p83 = scmp.ne.s32.totalorder %s69, %s70
      %p84 = scmp.eq.s32.totalorder %s20, 1
      %p85 = por %p83, %p84
      %p87 = scmp.ne.s32.totalorder %s70, %s86
      %p88 = scmp.eq.s32.totalorder %s20, 0
      %p89 = por %p87, %p88
      %s90 = ssub.s32 %s21, %s33
      %p91 = scmp.eq.s32.totalorder %s90, 0
      %s93 = sadd.s32 %s92, 1
      %s94 = scalar_select %p91, %s92, %s93
      %p97 = pneg %p91
      %p98 = scmp.eq.s32.totalorder %s14, 1
      %p99 = por %p97, %p98
      %p100 = scmp.ne.s32.totalorder %s92, %s95
      %p101 = scmp.eq.s32.totalorder %s14, 0
      %p102 = por %p100, %p101
      %p103 = scmp.ne.s32.totalorder %s92, %s95
      %p104 = scmp.eq.s32.totalorder %s19, 1
      %p105 = por %p103, %p104
      %p106 = scmp.ne.s32.totalorder %s95, %s96
      %p107 = scmp.eq.s32.totalorder %s19, 0
      %p108 = por %p106, %p107
      %p109 = scmp.ne.s32.totalorder %s95, %s96
      %p110 = scmp.eq.s32.totalorder %s20, 1
      %p111 = por %p109, %p110
      %p113 = scmp.ne.s32.totalorder %s96, %s112
      %p114 = scmp.eq.s32.totalorder %s20, 0
      %p115 = por %p113, %p114
      %p116 = scmp.le.s32.totalorder 1, %s14
      %p117 = scmp.lt.s32.totalorder %s14, 3
      %p118 = pnand %p116, %p117
      %p119 = pneg %p118
      // Predicated region
      $region9: #{tpu_custom_call.1} parent=5 // pred_check
        _
      $region10: #{tpu_custom_call.1} parent=5 // pred_check_branch
        %121 = sbr.rel (%p118) target = $region12
      $region11: #{tpu_custom_call.1} parent=5 // pred_region
        %s122 = ssub.s32 %s14, 1
      $region12: #{tpu_custom_call.1} parent=5 // pred_fallthru
        _
      %p123 = scmp.lt.s32.totalorder %s14, 2
      // Predicated region
      $region13: #{tpu_custom_call.1} parent=5 // pred_check
        %p124 = pneg %p123
      $region14: #{tpu_custom_call.1} parent=5 // pred_check_branch
        %126 = sbr.rel (%p124) target = $region16
      $region15: #{tpu_custom_call.1} parent=5 // pred_region
        // Predicated region
        $region17: #{tpu_custom_call.1} parent=15 // pred_check
          %p127 = pneg %p48
        $region18: #{tpu_custom_call.1} parent=15 // pred_check_branch
          %129 = sbr.rel (%p127) target = $region20
        $region19: #{tpu_custom_call.1} parent=15 // pred_region
          %s130 = sand.u32 %s38, 1
          %s131 = scalar_lea.sflag [#allocation4], %s130
          %s132 = sand.u32 %s38, 1
          %s133 = smul.addr %s132, 32
          %s134 = scalar_lea.vmem [#allocation3], %s133
          %s135 = sadd.s32 %s21, %s22
          %s136 = smul.u32 4, %s135
          %138 = vsyncadd %s131, 0
          %s139 = smul.addr %s136, 8
          %s140 = scalar_lea.hbm %s0, %s139
          %s141 = sshll.u32 %s140, 4
          %s142 = int_to_ptr.hbm [resolvable:$true] %s141
          %s143 = sshll.u32 %s134, 4
          %s144 = int_to_ptr.vmem [resolvable:$true] %s143
          %149 = dma.hbm_to_vmem [thread:$0]  %s142, 512, %s144, %s131, 128, 128, 8
        $region20: #{tpu_custom_call.1} parent=15 // pred_fallthru
          _
        // Predicated region
        $region21: #{tpu_custom_call.1} parent=15 // pred_check
          %p150 = pneg %p76
        $region22: #{tpu_custom_call.1} parent=15 // pred_check_branch
          %152 = sbr.rel (%p150) target = $region24
        $region23: #{tpu_custom_call.1} parent=15 // pred_region
          %s153 = sand.u32 %s66, 1
          %s154 = scalar_lea.sflag [#allocation6], %s153
          %s155 = sand.u32 %s66, 1
          %s156 = smul.addr %s155, 32
          %s157 = scalar_lea.vmem [#allocation5], %s156
          %s158 = sadd.s32 %s21, %s22
          %s159 = smul.u32 4, %s158
          %161 = vsyncadd %s154, 0
          %s162 = smul.addr %s159, 8
          %s163 = scalar_lea.hbm %s1, %s162
          %s164 = sshll.u32 %s163, 4
          %s165 = int_to_ptr.hbm [resolvable:$true] %s164
          %s166 = sshll.u32 %s157, 4
          %s167 = int_to_ptr.vmem [resolvable:$true] %s166
          %172 = dma.hbm_to_vmem [thread:$0]  %s165, 512, %s167, %s154, 128, 128, 8
        $region24: #{tpu_custom_call.1} parent=15 // pred_fallthru
          _
      $region16: #{tpu_custom_call.1} parent=5 // pred_fallthru
        _
      %p173 = scmp.le.s32.totalorder 1, %s14
      %p174 = scmp.lt.s32.totalorder %s14, 3
      %p175 = pnand %p173, %p174
      %p176 = pneg %p175
      // Predicated region
      $region25: #{tpu_custom_call.1} parent=5 // pred_check
        _
      $region26: #{tpu_custom_call.1} parent=5 // pred_check_branch
        %178 = sbr.rel (%p175) target = $region28
      $region27: #{tpu_custom_call.1} parent=5 // pred_region
        %s179 = ssub.s32 %s14, 1
        %s180 = sand.u32 %s41, 1
        %s181 = scalar_lea.sflag [#allocation4], %s180
        %s182 = sand.u32 %s41, 1
        %s183 = smul.addr %s182, 32
        %s184 = scalar_lea.vmem [#allocation3], %s183
        // Predicated region
        $region29: #{tpu_custom_call.1} parent=27 // pred_check
          %p185 = pneg %p54
        $region30: #{tpu_custom_call.1} parent=27 // pred_check_branch
          %187 = sbr.rel (%p185) target = $region32
        $region31: #{tpu_custom_call.1} parent=27 // pred_region
          %189 = dma.done %s181, 512
        $region32: #{tpu_custom_call.1} parent=27 // pred_fallthru
          _
        %s190 = sand.u32 %s69, 1
        %s191 = scalar_lea.sflag [#allocation6], %s190
        %s192 = sand.u32 %s69, 1
        %s193 = smul.addr %s192, 32
        %s194 = scalar_lea.vmem [#allocation5], %s193
        // Predicated region
        $region33: #{tpu_custom_call.1} parent=27 // pred_check
          %p195 = pneg %p82
        $region34: #{tpu_custom_call.1} parent=27 // pred_check_branch
          %197 = sbr.rel (%p195) target = $region36
        $region35: #{tpu_custom_call.1} parent=27 // pred_region
          %199 = dma.done %s191, 512
        $region36: #{tpu_custom_call.1} parent=27 // pred_fallthru
          _
        %s200 = sand.u32 %s41, 1
        %s201 = scalar_lea.sflag [#allocation4], %s200
        %s202 = sand.u32 %s41, 1
        %s203 = smul.addr %s202, 32
        %s204 = scalar_lea.vmem [#allocation3], %s203
        %p205 = pneg %p54
        %p206 = pneg %p51
        %s207 = sand.u32 %s69, 1
        %s208 = scalar_lea.sflag [#allocation6], %s207
        %s209 = sand.u32 %s69, 1
        %s210 = smul.addr %s209, 32
        %s211 = scalar_lea.vmem [#allocation5], %s210
        %p212 = pneg %p82
        %p213 = pneg %p79
        %p214 = pneg %p108
        %p215 = pneg %p105
        %p216 = scmp.lt.s32.totalorder %s23, 1
        %s217 = scalar_select %p216, %s23, 1
        %s218 = scalar_lea.vmem %s2, %s217
        %s219 = sadd.s32 %s23, %s24
        %s220 = smul.u32 4, %s219
        %s221 = sadd.s32 %s23, %s24
        %s222 = smul.u32 4, %s221
        %p223 = scmp.lt.s32.totalorder %s23, 1
        %s224 = scalar_select %p223, %s23, 1
        %s225 = scalar_lea.vmem %s2, %s224
        %p226 = scmp.eq.s32.totalorder %s24, 0
        // Predicated region
        $region37: #{tpu_custom_call.1} parent=27 // pred_check
          %p227 = pneg %p226
        $region38: #{tpu_custom_call.1} parent=27 // pred_check_branch
          %229 = sbr.rel (%p227) target = $region40
        $region39: #{tpu_custom_call.1} parent=27 // pred_region
          %230 = vst [vmem:[#allocation2] sm:$0xff] 0.0
          %231 = vst [vmem:[#allocation2 + $0x8] sm:$0xff] 0.0
          %232 = vst [vmem:[#allocation2 + $0x10] sm:$0xff] 0.0
          %233 = vst [vmem:[#allocation2 + $0x18] sm:$0xff] 0.0
        $region40: #{tpu_custom_call.1} parent=27 // pred_fallthru
          _
        %v234 = vld [vmem:[%s184] sm:$0xff]
        %v235 = vld [vmem:[%s184 + $0x8] sm:$0xff]
        %v236 = vld [vmem:[%s184 + $0x10] sm:$0xff]
        %v237 = vld [vmem:[%s184 + $0x18] sm:$0xff]
        %v238 = vld [vmem:[%s194] sm:$0xff]
        %v239 = vld [vmem:[%s194 + $0x8] sm:$0xff]
        %v240 = vld [vmem:[%s194 + $0x10] sm:$0xff]
        %v241 = vld [vmem:[%s194 + $0x18] sm:$0xff]
        %v242 = vxor.u32 %v234, 2147483648
        %v243 = vxor.u32 %v235, 2147483648
        %v244 = vxor.u32 %v236, 2147483648
        %v245 = vxor.u32 %v237, 2147483648
        %v246 = vmul.f32 %v242, 1.442695
        %v247 = vpow.pop %v246
        %v248 = vmul.f32 %v243, 1.442695
        %v249 = vpow.pop %v248
        %v250 = vmul.f32 %v244, 1.442695
        %v251 = vpow.pop %v250
        %v252 = vmul.f32 %v245, 1.442695
        %v253 = vpow.pop %v252
        %v254 = vadd.f32 %v247, 1.0
        %v255 = vadd.f32 %v249, 1.0
        %v256 = vadd.f32 %v251, 1.0
        %v257 = vadd.f32 %v253, 1.0
        %v258 = vrcp.pop %v254
        %v259 = vmul.f32 %v254, %v258
        %v260 = vsub.f32 1.0, %v259
        %v261 = vmul.f32 %v258, %v260
        %v262 = vadd.f32 %v258, %v261
        %vm263 = vweird.f32 %v254
        %vm264 = vweird.f32 %v258
        %vm265 = vmor %vm263, %vm264
        %v266 = vsel %vm265, %v258, %v262
        %v267 = vand.u32 2147483647, %v254
        %vm268 = vcmp.eq.f32.partialorder %v267, 8.507059e+37
        %v269 = vand.u32 %v254, 2147483648
        %v270 = vor.u32 1.1754944e-38, %v269
        %v271 = vsel %vm268, %v270, %v266
        %v272 = vmul.f32 1.0, %v271
        %v273 = vrcp.pop %v255
        %v274 = vmul.f32 %v255, %v273
        %v275 = vsub.f32 1.0, %v274
        %v276 = vmul.f32 %v273, %v275
        %v277 = vadd.f32 %v273, %v276
        %vm278 = vweird.f32 %v255
        %vm279 = vweird.f32 %v273
        %vm280 = vmor %vm278, %vm279
        %v281 = vsel %vm280, %v273, %v277
        %v282 = vand.u32 2147483647, %v255
        %vm283 = vcmp.eq.f32.partialorder %v282, 8.507059e+37
        %v284 = vand.u32 %v255, 2147483648
        %v285 = vor.u32 1.1754944e-38, %v284
        %v286 = vsel %vm283, %v285, %v281
        %v287 = vmul.f32 1.0, %v286
        %v288 = vrcp.pop %v256
        %v289 = vmul.f32 %v256, %v288
        %v290 = vsub.f32 1.0, %v289
        %v291 = vmul.f32 %v288, %v290
        %v292 = vadd.f32 %v288, %v291
        %vm293 = vweird.f32 %v256
        %vm294 = vweird.f32 %v288
        %vm295 = vmor %vm293, %vm294
        %v296 = vsel %vm295, %v288, %v292
        %v297 = vand.u32 2147483647, %v256
        %vm298 = vcmp.eq.f32.partialorder %v297, 8.507059e+37
        %v299 = vand.u32 %v256, 2147483648
        %v300 = vor.u32 1.1754944e-38, %v299
        %v301 = vsel %vm298, %v300, %v296
        %v302 = vmul.f32 1.0, %v301
        %v303 = vrcp.pop %v257
        %v304 = vmul.f32 %v257, %v303
        %v305 = vsub.f32 1.0, %v304
        %v306 = vmul.f32 %v303, %v305
        %v307 = vadd.f32 %v303, %v306
        %vm308 = vweird.f32 %v257
        %vm309 = vweird.f32 %v303
        %vm310 = vmor %vm308, %vm309
        %v311 = vsel %vm310, %v303, %v307
        %v312 = vand.u32 2147483647, %v257
        %vm313 = vcmp.eq.f32.partialorder %v312, 8.507059e+37
        %v314 = vand.u32 %v257, 2147483648
        %v315 = vor.u32 1.1754944e-38, %v314
        %v316 = vsel %vm313, %v315, %v311
        %v317 = vmul.f32 1.0, %v316
        %v318 = vmax.f32 %v272, 1e-07
        %v319 = vmax.f32 %v287, 1e-07
        %v320 = vmax.f32 %v302, 1e-07
        %v321 = vmax.f32 %v317, 1e-07
        %v322 = vmin.f32 %v318, 0.9999999
        %v323 = vmin.f32 %v319, 0.9999999
        %v324 = vmin.f32 %v320, 0.9999999
        %v325 = vmin.f32 %v321, 0.9999999
        %v326 = vmul.f32 %v322, %v238
        %v327 = vmul.f32 %v323, %v239
        %v328 = vmul.f32 %v324, %v240
        %v329 = vmul.f32 %v325, %v241
        %v330 = vsub.f32 1.0, %v322
        %v331 = vsub.f32 1.0, %v323
        %v332 = vsub.f32 1.0, %v324
        %v333 = vsub.f32 1.0, %v325
        %v334 = vsub.f32 1.0, %v238
        %v335 = vsub.f32 1.0, %v239
        %v336 = vsub.f32 1.0, %v240
        %v337 = vsub.f32 1.0, %v241
        %v338 = vmul.f32 %v330, %v334
        %v339 = vmul.f32 %v331, %v335
        %v340 = vmul.f32 %v332, %v336
        %v341 = vmul.f32 %v333, %v337
        %v342 = vadd.f32 %v326, %v338
        %v343 = vadd.f32 %v327, %v339
        %v344 = vadd.f32 %v328, %v340
        %v345 = vadd.f32 %v329, %v341
        %v346 = vmul.f32 %v238, 0.25
        %v347 = vmul.f32 %v239, 0.25
        %v348 = vmul.f32 %v240, 0.25
        %v349 = vmul.f32 %v241, 0.25
        %v350 = vmul.f32 %v334, 0.75
        %v351 = vmul.f32 %v335, 0.75
        %v352 = vmul.f32 %v336, 0.75
        %v353 = vmul.f32 %v337, 0.75
        %v354 = vadd.f32 %v346, %v350
        %v355 = vadd.f32 %v347, %v351
        %v356 = vadd.f32 %v348, %v352
        %v357 = vadd.f32 %v349, %v353
        %v358 = vsub.f32 1.0, %v342
        %v359 = vsub.f32 1.0, %v343
        %v360 = vsub.f32 1.0, %v344
        %v361 = vsub.f32 1.0, %v345
        %v362 = vmul.f32 %v358, %v358
        %v363 = vmul.f32 %v359, %v359
        %v364 = vmul.f32 %v360, %v360
        %v365 = vmul.f32 %v361, %v361
        %v366 = vsub.f32 0.0, %v354
        %v367 = vsub.f32 0.0, %v355
        %v368 = vsub.f32 0.0, %v356
        %v369 = vsub.f32 0.0, %v357
        %v370 = vmul.f32 %v366, %v362
        %v371 = vmul.f32 %v367, %v363
        %v372 = vmul.f32 %v368, %v364
        %v373 = vmul.f32 %v369, %v365
        %v374 = vlog2.pop %v342
        %v375 = vmul.f32 %v374, 0.6931472
        %v376 = vlog2.pop %v343
        %v377 = vmul.f32 %v376, 0.6931472
        %v378 = vlog2.pop %v344
        %v379 = vmul.f32 %v378, 0.6931472
        %v380 = vlog2.pop %v345
        %v381 = vmul.f32 %v380, 0.6931472
        %v382 = vmul.f32 %v370, %v375
        %v383 = vmul.f32 %v371, %v377
        %v384 = vmul.f32 %v372, %v379
        %v385 = vmul.f32 %v373, %v381
        %s386 = sadd.s32 %s23, %s24
        %s387 = smul.u32 %s386, 4096
        %v388 = vlaneseq
        %v389 = vshrl.u32 %v388, 7
        %v390 = vadd.s32 %v389, 8
        %v391 = vadd.s32 %v389, 16
        %v392 = vadd.s32 %v389, 24
        %v393 = vlaneseq
        %v394 = vand.u32 %v393, 127
        %v395 = vmul.u32 %v389, 128
        %v396 = vmul.u32 %v390, 128
        %v397 = vmul.u32 %v391, 128
        %v398 = vmul.u32 %v392, 128
        %v399 = vstv %s387
        %v400 = vadd.s32 %v399, %v395
        %v401 = vadd.s32 %v399, %v396
        %v402 = vadd.s32 %v399, %v397
        %v403 = vadd.s32 %v399, %v398
        %v404 = vadd.s32 %v400, %v394
        %v405 = vadd.s32 %v401, %v394
        %v406 = vadd.s32 %v402, %v394
        %v407 = vadd.s32 %v403, %v394
        %vm408 = vcmp.lt.s32.totalorder %v404, 2048
        %vm409 = vcmp.lt.s32.totalorder %v405, 2048
        %vm410 = vcmp.lt.s32.totalorder %v406, 2048
        %vm411 = vcmp.lt.s32.totalorder %v407, 2048
        %v412 = vsel %vm408, %v382, 0.0
        %v413 = vsel %vm409, %v383, 0.0
        %v414 = vsel %vm410, %v384, 0.0
        %v415 = vsel %vm411, %v385, 0.0
        %v416 = vld [vmem:[#allocation2] sm:$0xff]
        %v417 = vld [vmem:[#allocation2 + $0x8] sm:$0xff]
        %v418 = vld [vmem:[#allocation2 + $0x10] sm:$0xff]
        %v419 = vld [vmem:[#allocation2 + $0x18] sm:$0xff]
        %v420 = vadd.f32 %v416, %v412
        %v421 = vadd.f32 %v417, %v413
        %v422 = vadd.f32 %v418, %v414
        %v423 = vadd.f32 %v419, %v415
        %424 = vst [vmem:[#allocation2] sm:$0xff] %v420
        %425 = vst [vmem:[#allocation2 + $0x8] sm:$0xff] %v421
        %426 = vst [vmem:[#allocation2 + $0x10] sm:$0xff] %v422
        %427 = vst [vmem:[#allocation2 + $0x18] sm:$0xff] %v423
        // Predicated region
        $region41: #{tpu_custom_call.1} parent=27 // pred_check
          %p428 = pneg %p226
        $region42: #{tpu_custom_call.1} parent=27 // pred_check_branch
          %430 = sbr.rel (%p428) target = $region44
        $region43: #{tpu_custom_call.1} parent=27 // pred_region
          %v431 = vld [vmem:[#allocation2] sm:$0xff]
          %v432 = vld [vmem:[#allocation2 + $0x8] sm:$0xff]
          %v433 = vld [vmem:[#allocation2 + $0x10] sm:$0xff]
          %v434 = vld [vmem:[#allocation2 + $0x18] sm:$0xff]
          %v435 = vadd.f32 %v431, %v432
          %v436 = vadd.f32 %v435, %v433
          %v437 = vadd.f32 %v436, %v434
          %438 = vadd.xlane.f32.xlu0 %v437
          %v439 = vpop.xlane.xlu0 %438
          %v440 = vrot.slane %v439, 4
          %v441 = vadd.f32 %v439, %v440
          %v442 = vrot.slane %v441, 2
          %v443 = vadd.f32 %v441, %v442
          %v444 = vrot.slane %v443, 1
          %v445 = vadd.f32 %v443, %v444
          %s446 = vtos %v445
          %v447 = vstv %s446
          %v448 = vmul.f32 %v447, 0.00048828125
          %vm449 = vcmask 0
          %450 = vst.msk [vmem:[%s225] sm:$0x1] %vm449, %v448
        $region44: #{tpu_custom_call.1} parent=27 // pred_fallthru
          _
        %p451 = scmp.lt.s32.totalorder %s23, 1
        %s452 = scalar_select %p451, %s23, 1
        %s453 = scalar_lea.vmem %s2, %s452
        // Predicated region
        $region45: #{tpu_custom_call.1} parent=27 // pred_check
          %p454 = pneg %p105
        $region46: #{tpu_custom_call.1} parent=27 // pred_check_branch
          %456 = sbr.rel (%p454) target = $region48
        $region47: #{tpu_custom_call.1} parent=27 // pred_region
          _
        $region48: #{tpu_custom_call.1} parent=27 // pred_fallthru
          _
      $region28: #{tpu_custom_call.1} parent=5 // pred_fallthru
        _
      %p457 = scmp.le.s32.totalorder 2, %s14
      // Predicated region
      $region49: #{tpu_custom_call.1} parent=5 // pred_check
        %p458 = pneg %p457
      $region50: #{tpu_custom_call.1} parent=5 // pred_check_branch
        %460 = sbr.rel (%p458) target = $region52
      $region51: #{tpu_custom_call.1} parent=5 // pred_region
        %s461 = ssub.s32 %s14, 2
        // Predicated region
        $region53: #{tpu_custom_call.1} parent=51 // pred_check
          %p462 = pneg %p111
        $region54: #{tpu_custom_call.1} parent=51 // pred_check_branch
          %464 = sbr.rel (%p462) target = $region56
        $region55: #{tpu_custom_call.1} parent=51 // pred_region
          %p465 = scmp.lt.s32.totalorder %s25, 1
          %s466 = scalar_select %p465, %s25, 1
          %s467 = scalar_lea.vmem %s2, %s466
        $region56: #{tpu_custom_call.1} parent=51 // pred_fallthru
          _
      $region52: #{tpu_custom_call.1} parent=5 // pred_fallthru
        _
    $region6: #{tpu_custom_call.1} parent=1 // loop_footer
      %s18 = sadd.s32 1, %s14
    $region7: #{tpu_custom_call.1} parent=1 // loop_footer_branch
      %13 = sbr.rel target = $region3
    $region8: #{tpu_custom_call.1} parent=1 // loop_exit
      _
    %468 = vsyncpa [#allocation4], 1
    %s469 = scalar_lea.sflag [#allocation4], 1
    %470 = vsyncpa %s469, 1
    %471 = vsyncpa [#allocation6], 1
    %s472 = scalar_lea.sflag [#allocation6], 1
    %473 = vsyncpa %s472, 1

</llo_original>
